<compile_context>
chip_gen: v6e
topology: v6e:2x2x1
jax: 0.10.0
libtpu: 0.0.40
codegen_flags: <defaults>
</compile_context>

<pallas_src>
import functools
import math

import jax
import jax.numpy as jnp
from jax.experimental import pallas as pl
from jax.experimental.pallas import tpu as pltpu


def _label_smoothing_loss_kernel(pred_ref, tgt_ref, ptgt_ref, out_ref, *,
                                 smoothing_value, confidence, ignore_index,
                                 const_term, tile_n, n_rows):
    sv = jnp.float32(smoothing_value)
    conf = jnp.float32(confidence)

    # Cast to f32 on-chip (bf16 inputs keep HBM traffic halved; v5e has no
    # bf16 VPU/EUP anyway).
    preds = pred_ref[...].astype(jnp.float32)            # (tile_n, C)
    tgt = tgt_ref[...]                                    # (tile_n, 1) int32
    p_tgt = ptgt_ref[...]                                 # (tile_n, 1) f32
    p_ig = preds[:, ignore_index:ignore_index + 1]        # (tile_n, 1) static slice

    # ---- log-softmax pieces (never materialize full log_probs) ----
    row_max = jnp.max(preds, axis=-1, keepdims=True)      # (tile_n, 1)
    shifted = preds - row_max                              # (tile_n, C)
    sum_shift = jnp.sum(shifted, axis=-1, keepdims=True)   # (tile_n, 1)
    lse = jnp.log(jnp.sum(jnp.exp(shifted), axis=-1, keepdims=True))

    # ---- cross = sum_c model_prob[c] * log_softmax(preds)[c] ----
    # model_prob: conf at c==tgt, 0 at c==ignore_index, sv elsewhere, and
    # sum_c model_prob == 1 for non-ignored rows, so:
    #   cross = sv*sum(shifted) + (conf-sv)*(p_tgt-row_max)
    #           - sv*(p_ig-row_max) - lse
    cross = (sv * sum_shift
             + (conf - sv) * (p_tgt - row_max)
             - sv * (p_ig - row_max)
             - lse)                                        # (tile_n, 1)

    # ---- per-row loss; mask (a) tail rows past N (grid may overrun) and
    # (b) rows whose target is the pad index.  Mask BEFORE the block sum so
    # OOB garbage / NaN never reaches the partial. ----
    row_ids = (pl.program_id(0) * tile_n
               + jax.lax.broadcasted_iota(jnp.int32, (tile_n, 1), 0))
    keep = (row_ids < n_rows) & (tgt != ignore_index)
    row_loss = jnp.where(keep, jnp.float32(const_term) - cross,
                         jnp.float32(0.0))                 # (tile_n, 1)

    partial = jnp.sum(row_loss)                            # scalar partial sum
    # Lane-dense (1, 1, 128) block: single unmasked full-tile store.
    out_ref[...] = jnp.full(out_ref.shape, partial, dtype=jnp.float32)


def _round_up(x, m):
    return ((x + m - 1) // m) * m


def label_smoothing_loss(predictions, target, *,
                         trg_vocab_size,
                         label_smoothing=0.1,
                         ignore_index=0,
                         tile_n=None):
    """predictions: (N, C) float logits (any float dtype, NOT pre-cast);
    target: (N,) int. Returns the scalar KLDiv 'mean' loss."""
    n, c = predictions.shape
    assert c == trg_vocab_size
    smoothing_value = label_smoothing / (trg_vocab_size - 2)
    confidence = 1.0 - label_smoothing

    # sum_c xlogy(model_prob, model_prob) for a non-ignored row (compile-time).
    const_term = 0.0
    if confidence > 0.0:
        const_term += confidence * math.log(confidence)
    if smoothing_value > 0.0:
        const_term += (trg_vocab_size - 2) * smoothing_value * math.log(smoothing_value)

    itemsize = jnp.dtype(predictions.dtype).itemsize
    # Sublane packing multiple for the input dtype (f32: 8, bf16: 16, int8: 32).
    mult = 8 * max(1, 4 // itemsize)

    try:
        vmem_cap = int(pltpu.get_tpu_info().vmem_capacity_bytes)
    except Exception:
        vmem_cap = 64 * 1024 * 1024
    # v7x-like parts: 64 MiB VMEM per TensorCore, 2 TensorCores per chip.
    small_vmem = vmem_cap <= 80 * 1024 * 1024

    if tile_n is None:
        # Size by total on-chip footprint per grid step:
        #   2 double-buffered input blocks + ~4 full-tile f32 temporaries.
        bytes_per_row = c * (2 * itemsize + 4 * 4) + 64
        target_total = int(vmem_cap * 0.55)
        tile_n = max(mult, (target_total // bytes_per_row) // mult * mult)
    else:
        tile_n = max(mult, (tile_n // mult) * mult)
    # No point in a block taller than (rounded-up) N.
    tile_n = min(tile_n, _round_up(n, mult))
    # On 2-TensorCore chips make sure both cores get a block.
    if small_vmem and n > mult and pl.cdiv(n, tile_n) < 2:
        tile_n = _round_up(pl.cdiv(n, 2), mult)

    num_blocks = pl.cdiv(n, tile_n)

    # Conservative upper bound on actual VMEM use (2 input buffers + up to
    # 6 f32 full-tile planes), with headroom, capped under physical VMEM.
    footprint_upper = tile_n * c * (2 * itemsize + 6 * 4) + (1 << 20)
    vmem_limit = int(min(vmem_cap * 0.9,
                         max(32 * 1024 * 1024, footprint_upper + 4 * 1024 * 1024)))

    # Tiny wrapper-side gather of the target-column logit (O(N) bytes); this
    # removes the full-width iota/compare/select/multiply/reduce in-kernel.
    tgt2d = target.astype(jnp.int32).reshape(n, 1)
    idx = jnp.clip(tgt2d, 0, c - 1)
    p_tgt = jnp.take_along_axis(predictions, idx, axis=1).astype(jnp.float32)

    kernel = functools.partial(
        _label_smoothing_loss_kernel,
        smoothing_value=smoothing_value,
        confidence=confidence,
        ignore_index=ignore_index,
        const_term=const_term,
        tile_n=tile_n,
        n_rows=n,
    )

    total_elems = n * c
    cost = pl.CostEstimate(
        flops=int(5 * total_elems),
        transcendentals=int(total_elems),           # one exp per element
        bytes_accessed=int(total_elems * itemsize + n * 8 + num_blocks * 128 * 4),
    )

    partials = pl.pallas_call(
        kernel,
        out_shape=jax.ShapeDtypeStruct((num_blocks, 1, 128), jnp.float32),
        grid_spec=pltpu.PrefetchScalarGridSpec(
            num_scalar_prefetch=0,
            grid=(num_blocks,),
            in_specs=[
                pl.BlockSpec((tile_n, c), lambda i: (i, 0)),
                pl.BlockSpec((tile_n, 1), lambda i: (i, 0)),
                pl.BlockSpec((tile_n, 1), lambda i: (i, 0)),
            ],
            out_specs=pl.BlockSpec((1, 1, 128), lambda i: (i, 0, 0)),
        ),
        compiler_params=pltpu.CompilerParams(
            dimension_semantics=("parallel",),       # rows split across TCs on v7x
            vmem_limit_bytes=vmem_limit,
        ),
        cost_estimate=cost,
    )(predictions, tgt2d, p_tgt)

    # Tiny final reduction + mean in JAX (denominator uses the ORIGINAL N*C,
    # matching KLDivLoss(reduction='mean') which averages over all elements).
    return jnp.sum(partials[:, 0, 0]) / jnp.float32(n * c)


def _reference_loss(predictions, target, *, trg_vocab_size,
                    label_smoothing=0.1, ignore_index=0):
    """Pure-JAX reference mirroring the PyTorch module, for a sanity check."""
    n, c = predictions.shape
    smoothing_value = label_smoothing / (trg_vocab_size - 2)
    confidence = 1.0 - label_smoothing
    log_probs = jax.nn.log_softmax(predictions.astype(jnp.float32), axis=-1)
    col = jnp.arange(c)[None, :]
    base = jnp.where(col == ignore_index, 0.0, smoothing_value)
    model_prob = jnp.where(col == target[:, None], confidence, base)
    model_prob = jnp.where((target[:, None] == ignore_index), 0.0, model_prob)
    p_log_p = jnp.where(model_prob > 0,
                        model_prob * jnp.log(jnp.where(model_prob > 0,
                                                       model_prob, 1.0)),
                        0.0)
    kl = p_log_p - model_prob * log_probs
    return jnp.sum(kl) / (n * c)


if __name__ == "__main__":
    key = jax.random.PRNGKey(0)

    # --- small case matching the module spec: N token predictions, vocab V ---
    N, V = 8, 32
    k_pred, k_tgt, k2_pred, k2_tgt = jax.random.split(key, 4)
    predictions = jax.random.normal(k_pred, (N, V), dtype=jnp.float32)
    target = jax.random.randint(k_tgt, (N,), 0, V, dtype=jnp.int32)
    target = target.at[0].set(0)   # ensure at least one padding target

    loss = label_smoothing_loss(predictions, target, trg_vocab_size=V,
                                label_smoothing=0.1, ignore_index=0)
    loss = jax.block_until_ready(loss)
    ref = _reference_loss(predictions, target, trg_vocab_size=V,
                          label_smoothing=0.1, ignore_index=0)
    assert jnp.allclose(loss, ref, rtol=1e-5, atol=1e-6), (loss, ref)

    # --- multi-block + ragged tail (N not a tile multiple) + bf16 input path ---
    N2, V2 = 50, 256
    preds2 = jax.random.normal(k2_pred, (N2, V2), dtype=jnp.float32).astype(jnp.bfloat16)
    tgt2 = jax.random.randint(k2_tgt, (N2,), 0, V2, dtype=jnp.int32)
    tgt2 = tgt2.at[3].set(0)

    loss2 = label_smoothing_loss(preds2, tgt2, trg_vocab_size=V2,
                                 label_smoothing=0.1, ignore_index=0,
                                 tile_n=16)
    loss2 = jax.block_until_ready(loss2)
    ref2 = _reference_loss(preds2, tgt2, trg_vocab_size=V2,
                           label_smoothing=0.1, ignore_index=0)
    assert jnp.allclose(loss2, ref2, rtol=1e-4, atol=1e-5), (loss2, ref2)

    print("KERNEL_OK")
</pallas_src>

<mosaic_0001>
module attributes {stable_mosaic.version = 11 : i64} {
  func.func @_label_smoothing_loss_kernel(%arg0: i32, %arg1: memref<8x32xf32, #tpu.memory_space<vmem>>, %arg2: memref<8x1xi32, #tpu.memory_space<vmem>>, %arg3: memref<8x1xf32, #tpu.memory_space<vmem>>, %arg4: memref<1x1x128xf32, #tpu.memory_space<vmem>>) attributes {dimension_semantics = [#tpu.dimension_semantics<parallel>], iteration_bounds = array<i64: 1>, scalar_prefetch = 0 : i64, scratch_operands = 0 : i64, tpu.core_type = #tpu.core_type<tc>, window_params = [{transform_indices = @transform_0, window_bounds = array<i64: 8, 32>}, {transform_indices = @transform_1, window_bounds = array<i64: 8, 1>}, {transform_indices = @transform_2, window_bounds = array<i64: 8, 1>}, {transform_indices = @transform_3, window_bounds = array<i64: 1, 1, 128>}]} {
    %c0 = arith.constant 0 : index
    %c0_0 = arith.constant 0 : index
    %0 = vector.load %arg1[%c0, %c0_0] : memref<8x32xf32, #tpu.memory_space<vmem>>, vector<8x32xf32>
    %c0_1 = arith.constant 0 : index
    %c0_2 = arith.constant 0 : index
    %1 = vector.load %arg2[%c0_1, %c0_2] : memref<8x1xi32, #tpu.memory_space<vmem>>, vector<8x1xi32>
    %c0_3 = arith.constant 0 : index
    %c0_4 = arith.constant 0 : index
    %2 = vector.load %arg3[%c0_3, %c0_4] : memref<8x1xf32, #tpu.memory_space<vmem>>, vector<8x1xf32>
    %3 = vector.extract_strided_slice %0 {offsets = [0, 0], sizes = [8, 1], strides = [1, 1]} : vector<8x32xf32> to vector<8x1xf32>
    %cst = arith.constant dense<0xFF800000> : vector<8xf32>
    %4 = vector.multi_reduction <maximumf>, %0, %cst [1] : vector<8x32xf32> to vector<8xf32>
    %5 = vector.shape_cast %4 : vector<8xf32> to vector<8x1xf32>
    %6 = vector.broadcast %5 : vector<8x1xf32> to vector<8x32xf32>
    %7 = arith.subf %0, %6 : vector<8x32xf32>
    %cst_5 = arith.constant dense<0.000000e+00> : vector<8xf32>
    %8 = vector.multi_reduction <add>, %7, %cst_5 [1] : vector<8x32xf32> to vector<8xf32>
    %9 = vector.shape_cast %8 : vector<8xf32> to vector<8x1xf32>
    %10 = math.exp %7 : vector<8x32xf32>
    %cst_6 = arith.constant dense<0.000000e+00> : vector<8xf32>
    %11 = vector.multi_reduction <add>, %10, %cst_6 [1] : vector<8x32xf32> to vector<8xf32>
    %12 = vector.shape_cast %11 : vector<8xf32> to vector<8x1xf32>
    %13 = math.log %12 : vector<8x1xf32>
    %cst_7 = arith.constant 0.00333333341 : f32
    %14 = vector.broadcast %cst_7 : f32 to vector<8x1xf32>
    %15 = arith.mulf %14, %9 : vector<8x1xf32>
    %cst_8 = arith.constant 0.899999976 : f32
    %cst_9 = arith.constant 0.00333333341 : f32
    %16 = arith.subf %cst_8, %cst_9 : f32
    %17 = arith.subf %2, %5 : vector<8x1xf32>
    %18 = vector.broadcast %16 : f32 to vector<8x1xf32>
    %19 = arith.mulf %18, %17 : vector<8x1xf32>
    %20 = arith.addf %15, %19 : vector<8x1xf32>
    %21 = arith.subf %3, %5 : vector<8x1xf32>
    %cst_10 = arith.constant 0.00333333341 : f32
    %22 = vector.broadcast %cst_10 : f32 to vector<8x1xf32>
    %23 = arith.mulf %22, %21 : vector<8x1xf32>
    %24 = arith.subf %20, %23 : vector<8x1xf32>
    %25 = arith.subf %24, %13 : vector<8x1xf32>
    %c8_i32 = arith.constant 8 : i32
    %26 = arith.muli %arg0, %c8_i32 : i32
    %27 = tpu.iota {dimensions = array<i32: 0>} : vector<8x1xi32>
    %28 = vector.broadcast %26 : i32 to vector<8x1xi32>
    %29 = arith.addi %28, %27 : vector<8x1xi32>
    %c8_i32_11 = arith.constant 8 : i32
    %30 = vector.broadcast %c8_i32_11 : i32 to vector<8x1xi32>
    %31 = arith.cmpi slt, %29, %30 : vector<8x1xi32>
    %c0_i32 = arith.constant 0 : i32
    %32 = vector.broadcast %c0_i32 : i32 to vector<8x1xi32>
    %33 = arith.cmpi ne, %1, %32 : vector<8x1xi32>
    %34 = arith.andi %31, %33 : vector<8x1xi1>
    %cst_12 = arith.constant -0.665202737 : f32
    %35 = vector.broadcast %cst_12 : f32 to vector<8x1xf32>
    %36 = arith.subf %35, %25 : vector<8x1xf32>
    %cst_13 = arith.constant 0.000000e+00 : f32
    %37 = vector.broadcast %cst_13 : f32 to vector<8x1xf32>
    %38 = arith.select %34, %36, %37 : vector<8x1xi1>, vector<8x1xf32>
    %39 = vector.shape_cast %38 : vector<8x1xf32> to vector<1x8x1xf32>
    %cst_14 = arith.constant dense<0.000000e+00> : vector<1xf32>
    %40 = vector.multi_reduction <add>, %39, %cst_14 [1, 2] : vector<1x8x1xf32> to vector<1xf32>
    %41 = vector.shape_cast %40 : vector<1xf32> to vector<1x1x1xf32>
    %42 = vector.extract %41[0, 0, 0] : f32 from vector<1x1x1xf32>
    %43 = vector.broadcast %42 : f32 to vector<1x1x128xf32>
    %c0_15 = arith.constant 0 : index
    %c0_16 = arith.constant 0 : index
    %c0_17 = arith.constant 0 : index
    %44 = vector.load %arg4[%c0_15, %c0_16, %c0_17] : memref<1x1x128xf32, #tpu.memory_space<vmem>>, vector<1x1x128xf32>
    tpu.vector_store %arg4[%c0_15, %c0_16, %c0_17], %43 {strides = array<i32>} : memref<1x1x128xf32, #tpu.memory_space<vmem>>, vector<1x1x128xf32>,
    return
  }
  func.func @transform_0(%arg0: i32) -> (i32, i32) {
    %c0_i32 = arith.constant 0 : i32
    %c0_i32_0 = arith.constant 0 : i32
    return %arg0, %c0_i32 : i32, i32
  }
  func.func @transform_1(%arg0: i32) -> (i32, i32) {
    %c0_i32 = arith.constant 0 : i32
    %c0_i32_0 = arith.constant 0 : i32
    return %arg0, %c0_i32 : i32, i32
  }
  func.func @transform_2(%arg0: i32) -> (i32, i32) {
    %c0_i32 = arith.constant 0 : i32
    %c0_i32_0 = arith.constant 0 : i32
    return %arg0, %c0_i32 : i32, i32
  }
  func.func @transform_3(%arg0: i32) -> (i32, i32, i32) {
    %c0_i32 = arith.constant 0 : i32
    %c0_i32_0 = arith.constant 0 : i32
    %c0_i32_1 = arith.constant 0 : i32
    return %arg0, %c0_i32, %c0_i32_0 : i32, i32, i32
  }
}

</mosaic_0001>

<llo_original>
// kernel: tpu_custom_call.1
$region0: #{tpu_custom_call.1}
  #allocation0 [shape = 'u32[]', space=smem, size = 0x4, offset = 0x4, fixed_abs, tag = 'smem constant byte address 0x4 - core index']
  #allocation1 [shape = 'u32[144,128]{1,0:T(1,128)}', space=vmem, size = 0x12000, scoped, tag = 'internal scratch']
  %s0 = inlined_call_operand.vmem [shape: f32[8,32], index: 0, kind: input, shape index: {}]
  %s1 = inlined_call_operand.vmem [shape: s32[8,1], index: 1, kind: input, shape index: {}]
  %s2 = inlined_call_operand.vmem [shape: f32[8,1], index: 2, kind: input, shape index: {}]
  %s3 = inlined_call_operand.hbm [shape: f32[1,1,128], index: 3, kind: output, shape index: {}]
  %s4 = sld [smem:[#allocation0]]
  $region22: #{tpu_custom_call.1} parent=0
    _
  %s6 = ssub.s32 1, %s4
  %s7 = scalar_select 0, %s6, %s4
  $region1: #{tpu_custom_call.1} parent=0
    #allocation2 [shape = 'u8[512]{0}', space=vmem, size = 0x400, scoped, tag = 'output window, operand 0, single buffered']
    #allocation3 [shape = 's32[1]{0}', space=sflag, size = 0x4, scoped, tag = 'scoped memory for tpu_custom_call.1']
    %8 = vsyncpa [#allocation3], 0
    // Predicated region
    $region2: #{tpu_custom_call.1} parent=1 // pred_check
      _
    $region3: #{tpu_custom_call.1} parent=1 // pred_check_branch
      %10 = sbr.rel (0) target = $region5
    $region4: #{tpu_custom_call.1} parent=1 // pred_region
      _
    $region5: #{tpu_custom_call.1} parent=1 // pred_fallthru
      _
    // Predicated region
    $region6: #{tpu_custom_call.1} parent=1 // pred_check
      _
    $region7: #{tpu_custom_call.1} parent=1 // pred_check_branch
      %12 = sbr.rel (0) target = $region9
    $region8: #{tpu_custom_call.1} parent=1 // pred_region
      _
    $region9: #{tpu_custom_call.1} parent=1 // pred_fallthru
      _
    // Predicated region
    $region10: #{tpu_custom_call.1} parent=1 // pred_check
      _
    $region11: #{tpu_custom_call.1} parent=1 // pred_check_branch
      %14 = sbr.rel (0) target = $region13
    $region12: #{tpu_custom_call.1} parent=1 // pred_region
      _
    $region13: #{tpu_custom_call.1} parent=1 // pred_fallthru
      _
    %v15 = vld [vmem:[%s0] sm:$0xff]
    %v16 = vld [vmem:[%s1] sm:$0xff]
    %v17 = vld [vmem:[%s2] sm:$0xff]
    %vm18 = vcmask 261120
    %v19 = vsel %vm18, %v15, -inf
    %20 = vmax.xlane.f32.xlu0 %v19
    %v21 = vpop.xlane.xlu0 %20
    %v22 = vsub.f32 %v15, %v21
    %v23 = vsel %vm18, %v22, 0.0
    %24 = vadd.xlane.f32.xlu0 %v23
    %v25 = vpop.xlane.xlu0 %24
    %v26 = vmul.f32 %v22, 1.442695
    %v27 = vpow.pop %v26
    %v28 = vsel %vm18, %v27, 0.0
    %29 = vadd.xlane.f32.xlu0 %v28
    %v30 = vpop.xlane.xlu0 %29
    %v31 = vlog2.pop %v30
    %v32 = vmul.f32 %v31, 0.6931472
    %v33 = vmul.f32 %v25, 0.0033333334
    %v34 = vsub.f32 %v17, %v21
    %v35 = vmul.f32 %v34, 0.89666665
    %v36 = vadd.f32 %v33, %v35
    %v37 = vmul.f32 %v22, 0.0033333334
    %v38 = vsub.f32 %v36, %v37
    %v39 = vsub.f32 %v38, %v32
    %s40 = smul.u32 0, 8
    %v41 = vlaneseq
    %v42 = vshrl.u32 %v41, 7
    %v43 = vstv %s40
    %v44 = vadd.s32 %v43, %v42
    %vm45 = vcmp.lt.s32.totalorder %v44, 8
    %vm46 = vcmp.ne.s32.totalorder %v16, 0
    %vm47 = vmand %vm45, %vm46
    %v48 = vsub.f32 -0.66520274, %v39
    %v49 = vsel %vm47, %v48, 0.0
    %vm50 = vcmask 7168
    %v51 = vsel %vm50, %v49, 0.0
    %52 = vadd.xlane.f32.xlu0 %v51
    %v53 = vpop.xlane.xlu0 %52
    %v54 = vrot.slane %v53, 4
    %v55 = vadd.f32 %v53, %v54
    %v56 = vrot.slane %v55, 2
    %v57 = vadd.f32 %v55, %v56
    %v58 = vrot.slane %v57, 1
    %v59 = vadd.f32 %v57, %v58
    %s60 = vtos %v59
    %v61 = vstv %s60
    %62 = vst [vmem:[#allocation2] sm:$0x1] %v61
    // Predicated region
    $region14: #{tpu_custom_call.1} parent=1 // pred_check
      _
    $region15: #{tpu_custom_call.1} parent=1 // pred_check_branch
      %64 = sbr.rel (0) target = $region17
    $region16: #{tpu_custom_call.1} parent=1 // pred_region
      %s66 = ssub.s32 16, 16
      %67 = vsyncadd [#allocation3], %s66
      %s69 = sshll.u32 [#allocation2], 4
      %s70 = int_to_ptr.vmem [resolvable:$true] %s69
      %72 = dma.vmem_to_hbm [thread:$0]  %s70, 16, %s3, [#allocation3]
    $region17: #{tpu_custom_call.1} parent=1 // pred_fallthru
      _
    // Predicated region
    $region18: #{tpu_custom_call.1} parent=1 // pred_check
      _
    $region19: #{tpu_custom_call.1} parent=1 // pred_check_branch
      %74 = sbr.rel (0) target = $region21
    $region20: #{tpu_custom_call.1} parent=1 // pred_region
      %75 = dma.done [#allocation3], 16
    $region21: #{tpu_custom_call.1} parent=1 // pred_fallthru
      _
    %76 = vsyncpa [#allocation3], 1

</llo_original>
